<compile_context>
chip_gen: v6e
topology: v6e:2x2x1
jax: 0.10.0
libtpu: 0.0.40
codegen_flags: <defaults>
</compile_context>

<pallas_src>
import jax
import jax.numpy as jnp
from jax import lax
from jax.experimental import pallas as pl
from jax.experimental.pallas import tpu as pltpu


def _stack_attention_cell_kernel(
    x_ref,      # (TB, H)       layer-0 input tile (input_size == hidden_size), f32
    ctx_ref,    # (TB, S, H)    encoder context tile, f32
    h0_ref,     # (L, TB, H)    previous hidden states, f32
    c0_ref,     # (L, TB, H)    previous cell states, f32
    wih_ref,    # (L, H, 4H)    W_ih^T per layer, bf16 (resident)
    whh_ref,    # (L, H, 4H)    W_hh^T per layer, bf16 (resident)
    b_ref,      # (L, 1, 4H)    b_ih + b_hh per layer, f32 (resident)
    cv_ref,     # out (TB, H)   attention context vector
    h_out_ref,  # out (L, TB, H) next hidden states
    c_out_ref,  # out (L, TB, H) next cell states
):
    L, TB, H = h0_ref.shape

    # g-gate lane mask, hoisted out of the layer loop.
    lane = lax.broadcasted_iota(jnp.int32, (TB, 4 * H), 1)
    is_g = (lane >= 2 * H) & (lane < 3 * H)

    x = x_ref[...]                                    # running layer input, f32
    for l in range(L):                                # n_layers: small, static unroll
        h_prev = h0_ref[l]                            # (TB, H) static zero-cost views
        c_prev = c0_ref[l]
        # Two independent MXU dots (bf16 operands, f32 accumulation).
        gates = (
            jnp.dot(x.astype(jnp.bfloat16), wih_ref[l],
                    preferred_element_type=jnp.float32)
            + jnp.dot(h_prev.astype(jnp.bfloat16), whh_ref[l],
                      preferred_element_type=jnp.float32)
            + b_ref[l]
        )                                             # (TB, 4H) f32, order i,f,g,o
        # One transcendental pass: tanh(z) = 2*sigmoid(2z) - 1 on the g lanes.
        s = jax.nn.sigmoid(jnp.where(is_g, 2.0 * gates, gates))
        act = jnp.where(is_g, 2.0 * s - 1.0, s)
        i_g = act[:, 0 * H:1 * H]
        f_g = act[:, 1 * H:2 * H]
        g_g = act[:, 2 * H:3 * H]
        o_g = act[:, 3 * H:4 * H]
        c_new = f_g * c_prev + i_g * g_g
        h_new = o_g * jnp.tanh(c_new)
        h_out_ref[l] = h_new
        c_out_ref[l] = c_new
        # dropout(p=0) == identity; residual taken since input_size == hidden_size.
        x = h_new + x

    # ---- dot-product attention on the MXU (softmax over S) ----
    ctx = ctx_ref[...].astype(jnp.bfloat16)                       # (TB, S, H)
    q = x.astype(jnp.bfloat16)[:, None, :]                        # (TB, 1, H)
    scores = jnp.einsum("bqh,bsh->bqs", q, ctx,
                        preferred_element_type=jnp.float32)[:, 0, :]   # (TB, S) f32
    m = jnp.max(scores, axis=-1, keepdims=True)
    e = jnp.exp(scores - m)
    denom = jnp.sum(e, axis=-1, keepdims=True)
    attn = e * pl.reciprocal(denom, approx=True)                  # softmax weights
    cv = jnp.einsum("bqs,bsh->bqh", attn.astype(jnp.bfloat16)[:, None, :], ctx,
                    preferred_element_type=jnp.float32)[:, 0, :]
    cv_ref[...] = cv.astype(cv_ref.dtype)


def stack_attention_cell_forward(inputs, context, hidden, params, *, batch_tile=256):
    """Mirrors StackAttentionCell.forward((inputs, context), hidden), get_attention=False.

    inputs : (B, H) f32      context: (B, S, H) f32
    hidden : ((L, B, H) h, (L, B, H) c)
    params : w_ih (L, H, 4H), w_hh (L, H, 4H), b (L, 1, 4H)   (gate order i,f,g,o)
    returns (context_vector (B, H), (next_h (L, B, H), next_c (L, B, H)))
    """
    h0, c0 = hidden
    L, B, H = h0.shape
    S = context.shape[1]
    # Residual add requires input_size == hidden_size (module precondition here).
    assert inputs.shape == (B, H), "kernel assumes input_size == hidden_size"
    assert context.shape == (B, S, H)

    # Batch tiling (multiple of 8 when tiled; single full-batch tile otherwise).
    if B <= batch_tile:
        tb = B
    else:
        tb = batch_tile
        assert tb % 8 == 0, "batch_tile must be a multiple of 8 (sublane tiling)"
    nb = pl.cdiv(B, tb)
    Bp = nb * tb
    if Bp != B:
        pad = Bp - B
        inputs = jnp.pad(inputs, ((0, pad), (0, 0)))
        context = jnp.pad(context, ((0, pad), (0, 0), (0, 0)))
        h0 = jnp.pad(h0, ((0, 0), (0, pad), (0, 0)))
        c0 = jnp.pad(c0, ((0, 0), (0, pad), (0, 0)))

    # bf16 weights: halves weight HBM/VMEM bytes and feeds the bf16 MXU.
    w_ih = params["w_ih"].astype(jnp.bfloat16)
    w_hh = params["w_hh"].astype(jnp.bfloat16)
    bias = params["b"].astype(jnp.float32)

    flops = 16 * L * Bp * H * H + 4 * Bp * S * H
    transcendentals = Bp * L * 5 * H + Bp * S
    bytes_accessed = (
        4 * (Bp * H + Bp * S * H + 4 * L * Bp * H + Bp * H)   # f32 activations/states
        + 2 * (w_ih.size + w_hh.size) + 4 * bias.size          # resident params
    )

    grid_spec = pltpu.PrefetchScalarGridSpec(
        num_scalar_prefetch=0,
        grid=(nb,),
        in_specs=[
            pl.BlockSpec((tb, H), lambda i: (i, 0)),
            pl.BlockSpec((tb, S, H), lambda i: (i, 0, 0)),
            pl.BlockSpec((L, tb, H), lambda i: (0, i, 0)),
            pl.BlockSpec((L, tb, H), lambda i: (0, i, 0)),
            # Constant block index -> weights DMA'd once, VMEM-resident for all tiles.
            pl.BlockSpec((L, H, 4 * H), lambda i: (0, 0, 0)),
            pl.BlockSpec((L, H, 4 * H), lambda i: (0, 0, 0)),
            pl.BlockSpec((L, 1, 4 * H), lambda i: (0, 0, 0)),
        ],
        out_specs=[
            pl.BlockSpec((tb, H), lambda i: (i, 0)),
            pl.BlockSpec((L, tb, H), lambda i: (0, i, 0)),
            pl.BlockSpec((L, tb, H), lambda i: (0, i, 0)),
        ],
    )

    cv, h1, c1 = pl.pallas_call(
        _stack_attention_cell_kernel,
        out_shape=(
            jax.ShapeDtypeStruct((Bp, H), jnp.float32),
            jax.ShapeDtypeStruct((L, Bp, H), jnp.float32),
            jax.ShapeDtypeStruct((L, Bp, H), jnp.float32),
        ),
        grid_spec=grid_spec,
        compiler_params=pltpu.CompilerParams(
            dimension_semantics=("parallel",),
            vmem_limit_bytes=64 * 1024 * 1024,
        ),
        cost_estimate=pl.CostEstimate(
            flops=int(flops),
            transcendentals=int(transcendentals),
            bytes_accessed=int(bytes_accessed),
        ),
    )(inputs, context, h0, c0, w_ih, w_hh, bias)

    if Bp != B:
        cv, h1, c1 = cv[:B], h1[:, :B], c1[:, :B]
    return cv, (h1, c1)


# ---------------- pure-JAX f32 reference for correctness check ----------------
def _ref_forward(inputs, context, hidden, params):
    h0, c0 = hidden
    L, B, H = h0.shape
    w_ih, w_hh, b = params["w_ih"], params["w_hh"], params["b"]
    x = inputs
    next_h, next_c = [], []
    for l in range(L):
        gates = x @ w_ih[l] + h0[l] @ w_hh[l] + b[l]
        i = jax.nn.sigmoid(gates[:, 0 * H:1 * H])
        f = jax.nn.sigmoid(gates[:, 1 * H:2 * H])
        g = jnp.tanh(gates[:, 2 * H:3 * H])
        o = jax.nn.sigmoid(gates[:, 3 * H:4 * H])
        c = f * c0[l] + i * g
        h = o * jnp.tanh(c)
        next_h.append(h)
        next_c.append(c)
        x = h + x                       # residual (dims match), dropout(p=0)=identity
    h1 = jnp.stack(next_h, axis=0)
    c1 = jnp.stack(next_c, axis=0)
    scores = jnp.einsum("bh,bsh->bs", x, context)
    attn = jax.nn.softmax(scores, axis=-1)
    cv = jnp.einsum("bs,bsh->bh", attn, context)
    return cv, (h1, c1)


def _make_inputs(key, B, H, L, S):
    ks = jax.random.split(key, 7)
    scale = 0.1
    params = {
        "w_ih": scale * jax.random.normal(ks[0], (L, H, 4 * H), jnp.float32),
        "w_hh": scale * jax.random.normal(ks[1], (L, H, 4 * H), jnp.float32),
        "b":    scale * jax.random.normal(ks[2], (L, 1, 4 * H), jnp.float32),
    }
    x = jax.random.normal(ks[3], (B, H), jnp.float32)
    ctx = jax.random.normal(ks[4], (B, S, H), jnp.float32)
    h0 = scale * jax.random.normal(ks[5], (L, B, H), jnp.float32)
    c0 = scale * jax.random.normal(ks[6], (L, B, H), jnp.float32)
    return params, x, ctx, h0, c0


if __name__ == "__main__":
    H, L, S = 32, 2, 8   # hidden(=input) size, n_layers, context length

    # Case 1: module-sized shapes (single batch tile).
    B = 2
    params, x, ctx, h0, c0 = _make_inputs(jax.random.PRNGKey(0), B, H, L, S)
    fwd = jax.jit(lambda x, c, h, cc, p: stack_attention_cell_forward(x, c, (h, cc), p))
    cv, (h1, c1) = fwd(x, ctx, h0, c0, params)
    jax.block_until_ready((cv, h1, c1))

    cv_r, (h1_r, c1_r) = _ref_forward(x, ctx, (h0, c0), params)
    assert cv.shape == (B, H) and h1.shape == (L, B, H) and c1.shape == (L, B, H)
    # bf16 MXU operands -> loosened tolerances vs the f32 reference.
    assert jnp.allclose(h1, h1_r, atol=1e-2, rtol=1e-2)
    assert jnp.allclose(c1, c1_r, atol=1e-2, rtol=1e-2)
    assert jnp.allclose(cv, cv_r, atol=5e-2, rtol=5e-2)

    # Case 2: multi-tile batch grid (exercises the parallel grid + resident weights).
    B2 = 16
    params2, x2, ctx2, h02, c02 = _make_inputs(jax.random.PRNGKey(1), B2, H, L, S)
    fwd2 = jax.jit(lambda x, c, h, cc, p: stack_attention_cell_forward(
        x, c, (h, cc), p, batch_tile=8))
    cv2, (h12, c12) = fwd2(x2, ctx2, h02, c02, params2)
    jax.block_until_ready((cv2, h12, c12))

    cv2_r, (h12_r, c12_r) = _ref_forward(x2, ctx2, (h02, c02), params2)
    assert jnp.allclose(h12, h12_r, atol=1e-2, rtol=1e-2)
    assert jnp.allclose(c12, c12_r, atol=1e-2, rtol=1e-2)
    assert jnp.allclose(cv2, cv2_r, atol=5e-2, rtol=5e-2)

    print("KERNEL_OK")
</pallas_src>

<mosaic_0001>
module attributes {stable_mosaic.version = 11 : i64} {
  func.func @_stack_attention_cell_kernel(%arg0: i32, %arg1: memref<2x32xf32, #tpu.memory_space<vmem>>, %arg2: memref<2x8x32xf32, #tpu.memory_space<vmem>>, %arg3: memref<2x2x32xf32, #tpu.memory_space<vmem>>, %arg4: memref<2x2x32xf32, #tpu.memory_space<vmem>>, %arg5: memref<2x32x128xbf16, #tpu.memory_space<vmem>>, %arg6: memref<2x32x128xbf16, #tpu.memory_space<vmem>>, %arg7: memref<2x1x128xf32, #tpu.memory_space<vmem>>, %arg8: memref<2x32xf32, #tpu.memory_space<vmem>>, %arg9: memref<2x2x32xf32, #tpu.memory_space<vmem>>, %arg10: memref<2x2x32xf32, #tpu.memory_space<vmem>>) attributes {dimension_semantics = [#tpu.dimension_semantics<parallel>], iteration_bounds = array<i64: 1>, scalar_prefetch = 0 : i64, scratch_operands = 0 : i64, tpu.core_type = #tpu.core_type<tc>, window_params = [{transform_indices = @transform_0, window_bounds = array<i64: 2, 32>}, {transform_indices = @transform_1, window_bounds = array<i64: 2, 8, 32>}, {transform_indices = @transform_2, window_bounds = array<i64: 2, 2, 32>}, {transform_indices = @transform_3, window_bounds = array<i64: 2, 2, 32>}, {pipeline_mode = #tpu.pipeline_mode<synchronous>, transform_indices = @transform_4, window_bounds = array<i64: 2, 32, 128>}, {pipeline_mode = #tpu.pipeline_mode<synchronous>, transform_indices = @transform_5, window_bounds = array<i64: 2, 32, 128>}, {pipeline_mode = #tpu.pipeline_mode<synchronous>, transform_indices = @transform_6, window_bounds = array<i64: 2, 1, 128>}, {transform_indices = @transform_7, window_bounds = array<i64: 2, 32>}, {transform_indices = @transform_8, window_bounds = array<i64: 2, 2, 32>}, {transform_indices = @transform_9, window_bounds = array<i64: 2, 2, 32>}]} {
    %0 = tpu.iota {dimensions = array<i32: 1>} : vector<2x128xi32>
    %c64_i32 = arith.constant 64 : i32
    %1 = vector.broadcast %c64_i32 : i32 to vector<2x128xi32>
    %2 = arith.cmpi sge, %0, %1 : vector<2x128xi32>
    %c96_i32 = arith.constant 96 : i32
    %3 = vector.broadcast %c96_i32 : i32 to vector<2x128xi32>
    %4 = arith.cmpi slt, %0, %3 : vector<2x128xi32>
    %5 = arith.andi %2, %4 : vector<2x128xi1>
    %c0 = arith.constant 0 : index
    %c0_0 = arith.constant 0 : index
    %6 = vector.load %arg1[%c0, %c0_0] : memref<2x32xf32, #tpu.memory_space<vmem>>, vector<2x32xf32>
    %c0_1 = arith.constant 0 : index
    %c0_2 = arith.constant 0 : index
    %c0_3 = arith.constant 0 : index
    %7 = vector.load %arg3[%c0_1, %c0_2, %c0_3] : memref<2x2x32xf32, #tpu.memory_space<vmem>>, vector<1x2x32xf32>
    %8 = vector.shape_cast %7 : vector<1x2x32xf32> to vector<2x32xf32>
    %c0_4 = arith.constant 0 : index
    %c0_5 = arith.constant 0 : index
    %c0_6 = arith.constant 0 : index
    %9 = vector.load %arg4[%c0_4, %c0_5, %c0_6] : memref<2x2x32xf32, #tpu.memory_space<vmem>>, vector<1x2x32xf32>
    %10 = vector.shape_cast %9 : vector<1x2x32xf32> to vector<2x32xf32>
    %11 = arith.truncf %6 : vector<2x32xf32> to vector<2x32xbf16>
    %c0_7 = arith.constant 0 : index
    %c0_8 = arith.constant 0 : index
    %c0_9 = arith.constant 0 : index
    %12 = vector.load %arg5[%c0_7, %c0_8, %c0_9] : memref<2x32x128xbf16, #tpu.memory_space<vmem>>, vector<1x32x128xbf16>
    %13 = vector.shape_cast %12 : vector<1x32x128xbf16> to vector<32x128xbf16>
    %cst = arith.constant dense<0.000000e+00> : vector<2x128xf32>
    %14 = tpu.matmul %11, %13, %cst {dimension_numbers = #tpu.dot_dimension_numbers<[1], [0], [0], [1], [0, 0, 1, 1], [], []>} : vector<2x32xbf16>, vector<32x128xbf16>, vector<2x128xf32> -> vector<2x128xf32>
    %15 = arith.truncf %8 : vector<2x32xf32> to vector<2x32xbf16>
    %c0_10 = arith.constant 0 : index
    %c0_11 = arith.constant 0 : index
    %c0_12 = arith.constant 0 : index
    %16 = vector.load %arg6[%c0_10, %c0_11, %c0_12] : memref<2x32x128xbf16, #tpu.memory_space<vmem>>, vector<1x32x128xbf16>
    %17 = vector.shape_cast %16 : vector<1x32x128xbf16> to vector<32x128xbf16>
    %cst_13 = arith.constant dense<0.000000e+00> : vector<2x128xf32>
    %18 = tpu.matmul %15, %17, %cst_13 {dimension_numbers = #tpu.dot_dimension_numbers<[1], [0], [0], [1], [0, 0, 1, 1], [], []>} : vector<2x32xbf16>, vector<32x128xbf16>, vector<2x128xf32> -> vector<2x128xf32>
    %19 = arith.addf %14, %18 : vector<2x128xf32>
    %c0_14 = arith.constant 0 : index
    %c0_15 = arith.constant 0 : index
    %c0_16 = arith.constant 0 : index
    %20 = vector.load %arg7[%c0_14, %c0_15, %c0_16] : memref<2x1x128xf32, #tpu.memory_space<vmem>>, vector<1x1x128xf32>
    %21 = vector.shape_cast %20 : vector<1x1x128xf32> to vector<1x128xf32>
    %22 = vector.broadcast %21 : vector<1x128xf32> to vector<2x128xf32>
    %23 = arith.addf %19, %22 : vector<2x128xf32>
    %cst_17 = arith.constant 2.000000e+00 : f32
    %24 = vector.broadcast %cst_17 : f32 to vector<2x128xf32>
    %25 = arith.mulf %24, %23 : vector<2x128xf32>
    %26 = arith.select %5, %25, %23 : vector<2x128xi1>, vector<2x128xf32>
    %27 = arith.negf %26 : vector<2x128xf32>
    %28 = math.exp %27 : vector<2x128xf32>
    %cst_18 = arith.constant 1.000000e+00 : f32
    %29 = vector.broadcast %cst_18 : f32 to vector<2x128xf32>
    %30 = arith.addf %29, %28 : vector<2x128xf32>
    %31 = arith.divf %29, %30 : vector<2x128xf32>
    %cst_19 = arith.constant 2.000000e+00 : f32
    %32 = vector.broadcast %cst_19 : f32 to vector<2x128xf32>
    %33 = arith.mulf %32, %31 : vector<2x128xf32>
    %cst_20 = arith.constant 1.000000e+00 : f32
    %34 = vector.broadcast %cst_20 : f32 to vector<2x128xf32>
    %35 = arith.subf %33, %34 : vector<2x128xf32>
    %36 = arith.select %5, %35, %31 : vector<2x128xi1>, vector<2x128xf32>
    %37 = vector.extract_strided_slice %36 {offsets = [0, 0], sizes = [2, 32], strides = [1, 1]} : vector<2x128xf32> to vector<2x32xf32>
    %38 = vector.extract_strided_slice %36 {offsets = [0, 32], sizes = [2, 32], strides = [1, 1]} : vector<2x128xf32> to vector<2x32xf32>
    %39 = vector.extract_strided_slice %36 {offsets = [0, 64], sizes = [2, 32], strides = [1, 1]} : vector<2x128xf32> to vector<2x32xf32>
    %40 = vector.extract_strided_slice %36 {offsets = [0, 96], sizes = [2, 32], strides = [1, 1]} : vector<2x128xf32> to vector<2x32xf32>
    %41 = arith.mulf %38, %10 : vector<2x32xf32>
    %42 = arith.mulf %37, %39 : vector<2x32xf32>
    %43 = arith.addf %41, %42 : vector<2x32xf32>
    %44 = math.tanh %43 : vector<2x32xf32>
    %45 = arith.mulf %40, %44 : vector<2x32xf32>
    %c0_21 = arith.constant 0 : index
    %c0_22 = arith.constant 0 : index
    %c0_23 = arith.constant 0 : index
    %46 = vector.load %arg9[%c0_21, %c0_22, %c0_23] : memref<2x2x32xf32, #tpu.memory_space<vmem>>, vector<1x2x32xf32>
    %47 = vector.shape_cast %46 : vector<1x2x32xf32> to vector<2x32xf32>
    %48 = vector.shape_cast %45 : vector<2x32xf32> to vector<1x2x32xf32>
    tpu.vector_store %arg9[%c0_21, %c0_22, %c0_23], %48 {strides = array<i32>} : memref<2x2x32xf32, #tpu.memory_space<vmem>>, vector<1x2x32xf32>,
    %c0_24 = arith.constant 0 : index
    %c0_25 = arith.constant 0 : index
    %c0_26 = arith.constant 0 : index
    %49 = vector.load %arg10[%c0_24, %c0_25, %c0_26] : memref<2x2x32xf32, #tpu.memory_space<vmem>>, vector<1x2x32xf32>
    %50 = vector.shape_cast %49 : vector<1x2x32xf32> to vector<2x32xf32>
    %51 = vector.shape_cast %43 : vector<2x32xf32> to vector<1x2x32xf32>
    tpu.vector_store %arg10[%c0_24, %c0_25, %c0_26], %51 {strides = array<i32>} : memref<2x2x32xf32, #tpu.memory_space<vmem>>, vector<1x2x32xf32>,
    %52 = arith.addf %45, %6 : vector<2x32xf32>
    %c1 = arith.constant 1 : index
    %c0_27 = arith.constant 0 : index
    %c0_28 = arith.constant 0 : index
    %53 = vector.load %arg3[%c1, %c0_27, %c0_28] : memref<2x2x32xf32, #tpu.memory_space<vmem>>, vector<1x2x32xf32>
    %54 = vector.shape_cast %53 : vector<1x2x32xf32> to vector<2x32xf32>
    %c1_29 = arith.constant 1 : index
    %c0_30 = arith.constant 0 : index
    %c0_31 = arith.constant 0 : index
    %55 = vector.load %arg4[%c1_29, %c0_30, %c0_31] : memref<2x2x32xf32, #tpu.memory_space<vmem>>, vector<1x2x32xf32>
    %56 = vector.shape_cast %55 : vector<1x2x32xf32> to vector<2x32xf32>
    %57 = arith.truncf %52 : vector<2x32xf32> to vector<2x32xbf16>
    %c1_32 = arith.constant 1 : index
    %c0_33 = arith.constant 0 : index
    %c0_34 = arith.constant 0 : index
    %58 = vector.load %arg5[%c1_32, %c0_33, %c0_34] : memref<2x32x128xbf16, #tpu.memory_space<vmem>>, vector<1x32x128xbf16>
    %59 = vector.shape_cast %58 : vector<1x32x128xbf16> to vector<32x128xbf16>
    %cst_35 = arith.constant dense<0.000000e+00> : vector<2x128xf32>
    %60 = tpu.matmul %57, %59, %cst_35 {dimension_numbers = #tpu.dot_dimension_numbers<[1], [0], [0], [1], [0, 0, 1, 1], [], []>} : vector<2x32xbf16>, vector<32x128xbf16>, vector<2x128xf32> -> vector<2x128xf32>
    %61 = arith.truncf %54 : vector<2x32xf32> to vector<2x32xbf16>
    %c1_36 = arith.constant 1 : index
    %c0_37 = arith.constant 0 : index
    %c0_38 = arith.constant 0 : index
    %62 = vector.load %arg6[%c1_36, %c0_37, %c0_38] : memref<2x32x128xbf16, #tpu.memory_space<vmem>>, vector<1x32x128xbf16>
    %63 = vector.shape_cast %62 : vector<1x32x128xbf16> to vector<32x128xbf16>
    %cst_39 = arith.constant dense<0.000000e+00> : vector<2x128xf32>
    %64 = tpu.matmul %61, %63, %cst_39 {dimension_numbers = #tpu.dot_dimension_numbers<[1], [0], [0], [1], [0, 0, 1, 1], [], []>} : vector<2x32xbf16>, vector<32x128xbf16>, vector<2x128xf32> -> vector<2x128xf32>
    %65 = arith.addf %60, %64 : vector<2x128xf32>
    %c1_40 = arith.constant 1 : index
    %c0_41 = arith.constant 0 : index
    %c0_42 = arith.constant 0 : index
    %66 = vector.load %arg7[%c1_40, %c0_41, %c0_42] : memref<2x1x128xf32, #tpu.memory_space<vmem>>, vector<1x1x128xf32>
    %67 = vector.shape_cast %66 : vector<1x1x128xf32> to vector<1x128xf32>
    %68 = vector.broadcast %67 : vector<1x128xf32> to vector<2x128xf32>
    %69 = arith.addf %65, %68 : vector<2x128xf32>
    %cst_43 = arith.constant 2.000000e+00 : f32
    %70 = vector.broadcast %cst_43 : f32 to vector<2x128xf32>
    %71 = arith.mulf %70, %69 : vector<2x128xf32>
    %72 = arith.select %5, %71, %69 : vector<2x128xi1>, vector<2x128xf32>
    %73 = arith.negf %72 : vector<2x128xf32>
    %74 = math.exp %73 : vector<2x128xf32>
    %cst_44 = arith.constant 1.000000e+00 : f32
    %75 = vector.broadcast %cst_44 : f32 to vector<2x128xf32>
    %76 = arith.addf %75, %74 : vector<2x128xf32>
    %77 = arith.divf %75, %76 : vector<2x128xf32>
    %cst_45 = arith.constant 2.000000e+00 : f32
    %78 = vector.broadcast %cst_45 : f32 to vector<2x128xf32>
    %79 = arith.mulf %78, %77 : vector<2x128xf32>
    %cst_46 = arith.constant 1.000000e+00 : f32
    %80 = vector.broadcast %cst_46 : f32 to vector<2x128xf32>
    %81 = arith.subf %79, %80 : vector<2x128xf32>
    %82 = arith.select %5, %81, %77 : vector<2x128xi1>, vector<2x128xf32>
    %83 = vector.extract_strided_slice %82 {offsets = [0, 0], sizes = [2, 32], strides = [1, 1]} : vector<2x128xf32> to vector<2x32xf32>
    %84 = vector.extract_strided_slice %82 {offsets = [0, 32], sizes = [2, 32], strides = [1, 1]} : vector<2x128xf32> to vector<2x32xf32>
    %85 = vector.extract_strided_slice %82 {offsets = [0, 64], sizes = [2, 32], strides = [1, 1]} : vector<2x128xf32> to vector<2x32xf32>
    %86 = vector.extract_strided_slice %82 {offsets = [0, 96], sizes = [2, 32], strides = [1, 1]} : vector<2x128xf32> to vector<2x32xf32>
    %87 = arith.mulf %84, %56 : vector<2x32xf32>
    %88 = arith.mulf %83, %85 : vector<2x32xf32>
    %89 = arith.addf %87, %88 : vector<2x32xf32>
    %90 = math.tanh %89 : vector<2x32xf32>
    %91 = arith.mulf %86, %90 : vector<2x32xf32>
    %c1_47 = arith.constant 1 : index
    %c0_48 = arith.constant 0 : index
    %c0_49 = arith.constant 0 : index
    %92 = vector.load %arg9[%c1_47, %c0_48, %c0_49] : memref<2x2x32xf32, #tpu.memory_space<vmem>>, vector<1x2x32xf32>
    %93 = vector.shape_cast %92 : vector<1x2x32xf32> to vector<2x32xf32>
    %94 = vector.shape_cast %91 : vector<2x32xf32> to vector<1x2x32xf32>
    tpu.vector_store %arg9[%c1_47, %c0_48, %c0_49], %94 {strides = array<i32>} : memref<2x2x32xf32, #tpu.memory_space<vmem>>, vector<1x2x32xf32>,
    %c1_50 = arith.constant 1 : index
    %c0_51 = arith.constant 0 : index
    %c0_52 = arith.constant 0 : index
    %95 = vector.load %arg10[%c1_50, %c0_51, %c0_52] : memref<2x2x32xf32, #tpu.memory_space<vmem>>, vector<1x2x32xf32>
    %96 = vector.shape_cast %95 : vector<1x2x32xf32> to vector<2x32xf32>
    %97 = vector.shape_cast %89 : vector<2x32xf32> to vector<1x2x32xf32>
    tpu.vector_store %arg10[%c1_50, %c0_51, %c0_52], %97 {strides = array<i32>} : memref<2x2x32xf32, #tpu.memory_space<vmem>>, vector<1x2x32xf32>,
    %98 = arith.addf %91, %52 : vector<2x32xf32>
    %c0_53 = arith.constant 0 : index
    %c0_54 = arith.constant 0 : index
    %c0_55 = arith.constant 0 : index
    %99 = vector.load %arg2[%c0_53, %c0_54, %c0_55] : memref<2x8x32xf32, #tpu.memory_space<vmem>>, vector<2x8x32xf32>
    %100 = arith.truncf %99 : vector<2x8x32xf32> to vector<2x8x32xbf16>
    %101 = arith.truncf %98 : vector<2x32xf32> to vector<2x32xbf16>
    %102 = vector.shape_cast %101 : vector<2x32xbf16> to vector<2x1x32xbf16>
    "tpu.trace_start"() <{level = 10 : i32, message = "bqh,bsh->bqs"}> : () -> ()
    %cst_56 = arith.constant dense<0.000000e+00> : vector<2x1x8xf32>
    %103 = tpu.matmul %102, %100, %cst_56 {dimension_numbers = #tpu.dot_dimension_numbers<[2], [2], [1], [1], [0, 0, 0, 1, 1, 1], [0], [0]>} : vector<2x1x32xbf16>, vector<2x8x32xbf16>, vector<2x1x8xf32> -> vector<2x1x8xf32>
    "tpu.trace_stop"() : () -> ()
    %104 = vector.shape_cast %103 : vector<2x1x8xf32> to vector<2x8xf32>
    %cst_57 = arith.constant dense<0xFF800000> : vector<2xf32>
    %105 = vector.multi_reduction <maximumf>, %104, %cst_57 [1] : vector<2x8xf32> to vector<2xf32>
    %106 = vector.shape_cast %105 : vector<2xf32> to vector<2x1xf32>
    %107 = vector.broadcast %106 : vector<2x1xf32> to vector<2x8xf32>
    %108 = arith.subf %104, %107 : vector<2x8xf32>
    %109 = math.exp %108 : vector<2x8xf32>
    %cst_58 = arith.constant dense<0.000000e+00> : vector<2xf32>
    %110 = vector.multi_reduction <add>, %109, %cst_58 [1] : vector<2x8xf32> to vector<2xf32>
    %111 = vector.shape_cast %110 : vector<2xf32> to vector<2x1xf32>
    %112 = tpu.reciprocal %111 {approx = true} : vector<2x1xf32> -> vector<2x1xf32>
    %113 = vector.broadcast %112 : vector<2x1xf32> to vector<2x8xf32>
    %114 = arith.mulf %109, %113 : vector<2x8xf32>
    %115 = arith.truncf %114 : vector<2x8xf32> to vector<2x8xbf16>
    %116 = vector.shape_cast %115 : vector<2x8xbf16> to vector<2x1x8xbf16>
    "tpu.trace_start"() <{level = 10 : i32, message = "bqs,bsh->bqh"}> : () -> ()
    %cst_59 = arith.constant dense<0.000000e+00> : vector<2x1x32xf32>
    %117 = tpu.matmul %116, %100, %cst_59 {dimension_numbers = #tpu.dot_dimension_numbers<[2], [1], [1], [2], [0, 0, 0, 1, 1, 2], [0], [0]>} : vector<2x1x8xbf16>, vector<2x8x32xbf16>, vector<2x1x32xf32> -> vector<2x1x32xf32>
    "tpu.trace_stop"() : () -> ()
    %118 = vector.shape_cast %117 : vector<2x1x32xf32> to vector<2x32xf32>
    %c0_60 = arith.constant 0 : index
    %c0_61 = arith.constant 0 : index
    %119 = vector.load %arg8[%c0_60, %c0_61] : memref<2x32xf32, #tpu.memory_space<vmem>>, vector<2x32xf32>
    tpu.vector_store %arg8[%c0_60, %c0_61], %118 {strides = array<i32>} : memref<2x32xf32, #tpu.memory_space<vmem>>, vector<2x32xf32>,
    return
  }
  func.func @transform_0(%arg0: i32) -> (i32, i32) {
    %c0_i32 = arith.constant 0 : i32
    %c0_i32_0 = arith.constant 0 : i32
    return %arg0, %c0_i32 : i32, i32
  }
  func.func @transform_1(%arg0: i32) -> (i32, i32, i32) {
    %c0_i32 = arith.constant 0 : i32
    %c0_i32_0 = arith.constant 0 : i32
    %c0_i32_1 = arith.constant 0 : i32
    return %arg0, %c0_i32, %c0_i32_0 : i32, i32, i32
  }
  func.func @transform_2(%arg0: i32) -> (i32, i32, i32) {
    %c0_i32 = arith.constant 0 : i32
    %c0_i32_0 = arith.constant 0 : i32
    %c0_i32_1 = arith.constant 0 : i32
    return %c0_i32, %arg0, %c0_i32_0 : i32, i32, i32
  }
  func.func @transform_3(%arg0: i32) -> (i32, i32, i32) {
    %c0_i32 = arith.constant 0 : i32
    %c0_i32_0 = arith.constant 0 : i32
    %c0_i32_1 = arith.constant 0 : i32
    return %c0_i32, %arg0, %c0_i32_0 : i32, i32, i32
  }
  func.func @transform_4(%arg0: i32) -> (i32, i32, i32) {
    %c0_i32 = arith.constant 0 : i32
    %c0_i32_0 = arith.constant 0 : i32
    %c0_i32_1 = arith.constant 0 : i32
    %c0_i32_2 = arith.constant 0 : i32
    return %c0_i32, %c0_i32_0, %c0_i32_1 : i32, i32, i32
  }
  func.func @transform_5(%arg0: i32) -> (i32, i32, i32) {
    %c0_i32 = arith.constant 0 : i32
    %c0_i32_0 = arith.constant 0 : i32
    %c0_i32_1 = arith.constant 0 : i32
    %c0_i32_2 = arith.constant 0 : i32
    return %c0_i32, %c0_i32_0, %c0_i32_1 : i32, i32, i32
  }
  func.func @transform_6(%arg0: i32) -> (i32, i32, i32) {
    %c0_i32 = arith.constant 0 : i32
    %c0_i32_0 = arith.constant 0 : i32
    %c0_i32_1 = arith.constant 0 : i32
    %c0_i32_2 = arith.constant 0 : i32
    return %c0_i32, %c0_i32_0, %c0_i32_1 : i32, i32, i32
  }
  func.func @transform_7(%arg0: i32) -> (i32, i32) {
    %c0_i32 = arith.constant 0 : i32
    %c0_i32_0 = arith.constant 0 : i32
    return %arg0, %c0_i32 : i32, i32
  }
  func.func @transform_8(%arg0: i32) -> (i32, i32, i32) {
    %c0_i32 = arith.constant 0 : i32
    %c0_i32_0 = arith.constant 0 : i32
    %c0_i32_1 = arith.constant 0 : i32
    return %c0_i32, %arg0, %c0_i32_0 : i32, i32, i32
  }
  func.func @transform_9(%arg0: i32) -> (i32, i32, i32) {
    %c0_i32 = arith.constant 0 : i32
    %c0_i32_0 = arith.constant 0 : i32
    %c0_i32_1 = arith.constant 0 : i32
    return %c0_i32, %arg0, %c0_i32_0 : i32, i32, i32
  }
}

</mosaic_0001>

<llo_original>
// kernel: _lambda_.1
$region0: #{_lambda_.1}
  #allocation0 [shape = 'u32[]', space=smem, size = 0x4, offset = 0x4, fixed_abs, tag = 'smem constant byte address 0x4 - core index']
  #allocation1 [shape = 'u32[144,128]{1,0:T(1,128)}', space=vmem, size = 0x12000, scoped, tag = 'internal scratch']
  %s0 = inlined_call_operand.vmem [shape: f32[2,32], index: 0, kind: input, shape index: {}]
  %s1 = inlined_call_operand.vmem [shape: f32[2,8,32], index: 1, kind: input, shape index: {}]
  %s2 = inlined_call_operand.vmem [shape: f32[2,2,32], index: 2, kind: input, shape index: {}]
  %s3 = inlined_call_operand.vmem [shape: f32[2,2,32], index: 3, kind: input, shape index: {}]
  %s4 = inlined_call_operand.vmem [shape: bf16[2,32,128], index: 4, kind: input, shape index: {}]
  %s5 = inlined_call_operand.vmem [shape: bf16[2,32,128], index: 5, kind: input, shape index: {}]
  %s6 = inlined_call_operand.vmem [shape: f32[2,1,128], index: 6, kind: input, shape index: {}]
  %s7 = inlined_call_operand.hbm [shape: f32[2,32], index: 7, kind: output, shape index: {0}]
  %s8 = inlined_call_operand.hbm [shape: f32[2,2,32], index: 8, kind: output, shape index: {1}]
  %s9 = inlined_call_operand.hbm [shape: f32[2,2,32], index: 9, kind: output, shape index: {2}]
  %10 = xla_tuple %s7, %s8, %s9
  %s11 = sld [smem:[#allocation0]]
  $region54: #{_lambda_.1} parent=0
    _
  %s13 = ssub.s32 1, %s11
  %s14 = scalar_select 0, %s13, %s11
  $region1: #{_lambda_.1} parent=0
    #allocation2 [shape = 'u8[1024]{0}', space=vmem, size = 0x400, scoped, tag = 'output window, operand 0, single buffered']
    #allocation3 [shape = 's32[1]{0}', space=sflag, size = 0x4, scoped, tag = 'scoped memory for _lambda_.1']
    #allocation4 [shape = 'u8[2048]{0}', space=vmem, size = 0x800, scoped, tag = 'output window, operand 1, single buffered']
    #allocation5 [shape = 's32[1]{0}', space=sflag, size = 0x4, scoped, tag = 'scoped memory for _lambda_.1']
    #allocation6 [shape = 'u8[2048]{0}', space=vmem, size = 0x800, scoped, tag = 'output window, operand 2, single buffered']
    %15 = vsyncpa [#allocation3], 0
    %16 = vsyncpa [#allocation5], 0
    // Predicated region
    $region2: #{_lambda_.1} parent=1 // pred_check
      _
    $region3: #{_lambda_.1} parent=1 // pred_check_branch
      %18 = sbr.rel (0) target = $region5
    $region4: #{_lambda_.1} parent=1 // pred_region
      _
    $region5: #{_lambda_.1} parent=1 // pred_fallthru
      _
    // Predicated region
    $region6: #{_lambda_.1} parent=1 // pred_check
      _
    $region7: #{_lambda_.1} parent=1 // pred_check_branch
      %20 = sbr.rel (0) target = $region9
    $region8: #{_lambda_.1} parent=1 // pred_region
      _
    $region9: #{_lambda_.1} parent=1 // pred_fallthru
      _
    // Predicated region
    $region10: #{_lambda_.1} parent=1 // pred_check
      _
    $region11: #{_lambda_.1} parent=1 // pred_check_branch
      %22 = sbr.rel (0) target = $region13
    $region12: #{_lambda_.1} parent=1 // pred_region
      _
    $region13: #{_lambda_.1} parent=1 // pred_fallthru
      _
    // Predicated region
    $region14: #{_lambda_.1} parent=1 // pred_check
      _
    $region15: #{_lambda_.1} parent=1 // pred_check_branch
      %24 = sbr.rel (0) target = $region17
    $region16: #{_lambda_.1} parent=1 // pred_region
      _
    $region17: #{_lambda_.1} parent=1 // pred_fallthru
      _
    // Predicated region
    $region18: #{_lambda_.1} parent=1 // pred_check
      _
    $region19: #{_lambda_.1} parent=1 // pred_check_branch
      %26 = sbr.rel (0) target = $region21
    $region20: #{_lambda_.1} parent=1 // pred_region
      _
    $region21: #{_lambda_.1} parent=1 // pred_fallthru
      _
    // Predicated region
    $region22: #{_lambda_.1} parent=1 // pred_check
      _
    $region23: #{_lambda_.1} parent=1 // pred_check_branch
      %28 = sbr.rel (0) target = $region25
    $region24: #{_lambda_.1} parent=1 // pred_region
      _
    $region25: #{_lambda_.1} parent=1 // pred_fallthru
      _
    // Predicated region
    $region26: #{_lambda_.1} parent=1 // pred_check
      _
    $region27: #{_lambda_.1} parent=1 // pred_check_branch
      %30 = sbr.rel (0) target = $region29
    $region28: #{_lambda_.1} parent=1 // pred_region
      _
    $region29: #{_lambda_.1} parent=1 // pred_fallthru
      _
    %v32 = vlaneseq
    %v33 = vand.u32 %v32, 127
    %vm34 = vcmp.ge.s32.totalorder %v33, 64
    %vm35 = vcmp.lt.s32.totalorder %v33, 96
    %vm36 = vmand %vm34, %vm35
    %v37 = vld [vmem:[%s0] sm:$0x3]
    %v38 = vld [vmem:[%s2] sm:$0x3]
    %v39 = vld [vmem:[%s3] sm:$0x3]
    %v40 = vpack.c.bf16 %v37, %v37
    %v41 = vld [vmem:[%s4] sm:$0xf]
    %v42 = vld [vmem:[%s4 + $0x4] sm:$0xf]
    %v43 = vld [vmem:[%s4 + $0x8] sm:$0xf]
    %v44 = vld [vmem:[%s4 + $0xc] sm:$0xf]
    %v45 = vpack.c.bf16 %v38, %v38
    %v46 = vld [vmem:[%s5] sm:$0xf]
    %v47 = vld [vmem:[%s5 + $0x4] sm:$0xf]
    %v48 = vld [vmem:[%s5 + $0x8] sm:$0xf]
    %v49 = vld [vmem:[%s5 + $0xc] sm:$0xf]
    %v54 = vunpack.c.l.b16 %v46
    %v55 = vunpack.c.l.b16 %v47
    %v56 = vunpack.c.l.b16 %v48
    %v57 = vunpack.c.l.b16 %v49
    %v58 = vpack.c.b16 %v55, %v54
    %v59 = vpack.c.b16 %v57, %v56
    %vm62 = vcmask 261120
    %v64 = vsel %vm62, %v45, 0
    %66 = vmatprep.subr.bf16.mxu0 0
    %67 = vmatpush1.bf16.msra.mxu0 0
    %68 = vmatprep.subr.bf16.mxu0 0
    %69 = vmatpush1.bf16.msra.mxu0 0
    %70 = vmatprep.subr.bf16.mxu0 0
    %71 = vmatpush1.bf16.msra.mxu0 0
    %72 = vmatprep.subr.bf16.mxu0 0
    %73 = vmatpush1.bf16.msra.mxu0 0
    %74 = vmatprep.subr.bf16.mxu0 0
    %75 = vmatpush1.bf16.msra.mxu0 0
    %76 = vmatprep.subr.bf16.mxu0 0
    %77 = vmatpush1.bf16.msra.mxu0 0
    %78 = vmatprep.subr.bf16.mxu0 0
    %79 = vmatpush1.bf16.msra.mxu0 %v59
    %80 = vmatprep.subr.bf16.mxu0 0
    %81 = vmatpush1.bf16.msra.mxu0 %v58
    %82 = vmatprep.subr.bf16.mxu0 0
    %83 = vmatpush2.bf16.msra.mxu0 0
    %84 = vmatprep.subr.bf16.mxu0 0
    %85 = vmatpush2.bf16.msra.mxu0 0
    %86 = vmatprep.subr.bf16.mxu0 0
    %87 = vmatpush2.bf16.msra.mxu0 0
    %88 = vmatprep.subr.bf16.mxu0 0
    %89 = vmatpush2.bf16.msra.mxu0 0
    %90 = vmatprep.subr.bf16.mxu0 0
    %91 = vmatpush2.bf16.msra.mxu0 0
    %92 = vmatprep.subr.bf16.mxu0 0
    %93 = vmatpush2.bf16.msra.mxu0 0
    %94 = vmatprep.subr.bf16.mxu0 0
    %95 = vmatpush2.bf16.msra.mxu0 0
    %96 = vmatprep.subr.bf16.mxu0 0
    %97 = vmatpush2.bf16.msra.mxu0 0
    %98 = vmatprep.mubr.bf16.mxu0 0
    %99 = vmatmul.mubr.bf16.gmra.mxu0 %v64
    %v100 = vpop.f32.mrf.mxu0
    %v101 = vadd.f32 0.0, %v100
    %v102 = vpop.f32.mrf.mxu0
    %v103 = vpop.f32.mrf.mxu0
    %v104 = vpop.f32.mrf.mxu0
    %105 = vdwg.mxu0
    %v110 = vunpack.c.l.b16 %v41
    %v111 = vunpack.c.l.b16 %v42
    %v112 = vunpack.c.l.b16 %v43
    %v113 = vunpack.c.l.b16 %v44
    %v114 = vpack.c.b16 %v111, %v110
    %v115 = vpack.c.b16 %v113, %v112
    %v119 = vsel %vm62, %v40, 0
    %121 = vmatprep.subr.bf16.mxu0 0
    %122 = vmatpush1.bf16.msra.mxu0 0
    %123 = vmatprep.subr.bf16.mxu0 0
    %124 = vmatpush1.bf16.msra.mxu0 0
    %125 = vmatprep.subr.bf16.mxu0 0
    %126 = vmatpush1.bf16.msra.mxu0 0
    %127 = vmatprep.subr.bf16.mxu0 0
    %128 = vmatpush1.bf16.msra.mxu0 0
    %129 = vmatprep.subr.bf16.mxu0 0
    %130 = vmatpush1.bf16.msra.mxu0 0
    %131 = vmatprep.subr.bf16.mxu0 0
    %132 = vmatpush1.bf16.msra.mxu0 0
    %133 = vmatprep.subr.bf16.mxu0 0
    %134 = vmatpush1.bf16.msra.mxu0 %v115
    %135 = vmatprep.subr.bf16.mxu0 0
    %136 = vmatpush1.bf16.msra.mxu0 %v114
    %137 = vmatprep.subr.bf16.mxu0 0
    %138 = vmatpush2.bf16.msra.mxu0 0
    %139 = vmatprep.subr.bf16.mxu0 0
    %140 = vmatpush2.bf16.msra.mxu0 0
    %141 = vmatprep.subr.bf16.mxu0 0
    %142 = vmatpush2.bf16.msra.mxu0 0
    %143 = vmatprep.subr.bf16.mxu0 0
    %144 = vmatpush2.bf16.msra.mxu0 0
    %145 = vmatprep.subr.bf16.mxu0 0
    %146 = vmatpush2.bf16.msra.mxu0 0
    %147 = vmatprep.subr.bf16.mxu0 0
    %148 = vmatpush2.bf16.msra.mxu0 0
    %149 = vmatprep.subr.bf16.mxu0 0
    %150 = vmatpush2.bf16.msra.mxu0 0
    %151 = vmatprep.subr.bf16.mxu0 0
    %152 = vmatpush2.bf16.msra.mxu0 0
    %153 = vmatprep.mubr.bf16.mxu0 0
    %154 = vmatmul.mubr.bf16.gmra.mxu0 %v119
    %v155 = vpop.f32.mrf.mxu0
    %v156 = vadd.f32 %v101, %v155
    %v157 = vpop.f32.mrf.mxu0
    %v158 = vpop.f32.mrf.mxu0
    %v159 = vpop.f32.mrf.mxu0
    %160 = vdwg.mxu0
    %v161 = vld [vmem:[%s6] sm:$0x1]
    %v163 = vlaneseq
    %v164 = vshrl.u32 %v163, 7
    %v165 = vsub.s32 0, %v164
    %v166 = vrot.slane %v161, %v165
    %v168 = vadd.f32 %v156, %v166
    %v169 = vmul.f32 %v168, 2.0
    %v170 = vsel %vm36, %v169, %v168
    %v171 = vxor.u32 %v170, 2147483648
    %v172 = vmul.f32 %v171, 1.442695
    %v173 = vpow.pop %v172
    %v174 = vadd.f32 %v173, 1.0
    %v175 = vrcp.pop %v174
    %v176 = vmul.f32 1.0, %v175
    %v177 = vmul.f32 %v176, 2.0
    %v178 = vsub.f32 %v177, 1.0
    %v179 = vsel %vm36, %v178, %v176
    %181 = vrot.lane.b32.xlu0 %v39, 32
    %v182 = vpop.permute.xlu0 %181
    %v184 = vmul.f32 %v179, %v182
    %186 = vrot.lane.b32.xlu0 %v179, 64
    %v187 = vpop.permute.xlu0 %186
    %v189 = vmul.f32 %v179, %v187
    %191 = vrot.lane.b32.xlu0 %v189, 32
    %v192 = vpop.permute.xlu0 %191
    %v194 = vadd.f32 %v184, %v192
    %v195 = vtanh.pop %v194
    %197 = vrot.lane.b32.xlu0 %v195, 64
    %v198 = vpop.permute.xlu0 %197
    %v200 = vmul.f32 %v179, %v198
    %202 = vrot.lane.b32.xlu0 %v200, 32
    %v203 = vpop.permute.xlu0 %202
    %vm205 = vcmask 254976
    %206 = vst.msk [vmem:[#allocation4] sm:$0x3] %vm205, %v203
    %208 = vrot.lane.b32.xlu0 %v194, 96
    %v209 = vpop.permute.xlu0 %208
    %211 = vst.msk [vmem:[#allocation6] sm:$0x3] %vm205, %v209
    %213 = vrot.lane.b32.xlu0 %v37, 96
    %v214 = vpop.permute.xlu0 %213
    %v216 = vadd.f32 %v200, %v214
    %s217 = scalar_lea.vmem %s2, 2
    %v218 = vld [vmem:[%s217] sm:$0x3]
    %s219 = scalar_lea.vmem %s3, 2
    %v220 = vld [vmem:[%s219] sm:$0x3]
    %v221 = vpack.c.bf16 %v216, %v216
    %s222 = scalar_lea.vmem %s4, 16
    %v223 = vld [vmem:[%s222] sm:$0xf]
    %v224 = vld [vmem:[%s222 + $0x4] sm:$0xf]
    %v225 = vld [vmem:[%s222 + $0x8] sm:$0xf]
    %v226 = vld [vmem:[%s222 + $0xc] sm:$0xf]
    %v227 = vpack.c.bf16 %v218, %v218
    %s228 = scalar_lea.vmem %s5, 16
    %v229 = vld [vmem:[%s228] sm:$0xf]
    %v230 = vld [vmem:[%s228 + $0x4] sm:$0xf]
    %v231 = vld [vmem:[%s228 + $0x8] sm:$0xf]
    %v232 = vld [vmem:[%s228 + $0xc] sm:$0xf]
    %v237 = vunpack.c.l.b16 %v229
    %v238 = vunpack.c.l.b16 %v230
    %v239 = vunpack.c.l.b16 %v231
    %v240 = vunpack.c.l.b16 %v232
    %v241 = vpack.c.b16 %v238, %v237
    %v242 = vpack.c.b16 %v240, %v239
    %v246 = vsel %vm62, %v227, 0
    %248 = vmatprep.subr.bf16.mxu0 0
    %249 = vmatpush1.bf16.msra.mxu0 0
    %250 = vmatprep.subr.bf16.mxu0 0
    %251 = vmatpush1.bf16.msra.mxu0 0
    %252 = vmatprep.subr.bf16.mxu0 0
    %253 = vmatpush1.bf16.msra.mxu0 0
    %254 = vmatprep.subr.bf16.mxu0 0
    %255 = vmatpush1.bf16.msra.mxu0 0
    %256 = vmatprep.subr.bf16.mxu0 0
    %257 = vmatpush1.bf16.msra.mxu0 0
    %258 = vmatprep.subr.bf16.mxu0 0
    %259 = vmatpush1.bf16.msra.mxu0 0
    %260 = vmatprep.subr.bf16.mxu0 0
    %261 = vmatpush1.bf16.msra.mxu0 %v242
    %262 = vmatprep.subr.bf16.mxu0 0
    %263 = vmatpush1.bf16.msra.mxu0 %v241
    %264 = vmatprep.subr.bf16.mxu0 0
    %265 = vmatpush2.bf16.msra.mxu0 0
    %266 = vmatprep.subr.bf16.mxu0 0
    %267 = vmatpush2.bf16.msra.mxu0 0
    %268 = vmatprep.subr.bf16.mxu0 0
    %269 = vmatpush2.bf16.msra.mxu0 0
    %270 = vmatprep.subr.bf16.mxu0 0
    %271 = vmatpush2.bf16.msra.mxu0 0
    %272 = vmatprep.subr.bf16.mxu0 0
    %273 = vmatpush2.bf16.msra.mxu0 0
    %274 = vmatprep.subr.bf16.mxu0 0
    %275 = vmatpush2.bf16.msra.mxu0 0
    %276 = vmatprep.subr.bf16.mxu0 0
    %277 = vmatpush2.bf16.msra.mxu0 0
    %278 = vmatprep.subr.bf16.mxu0 0
    %279 = vmatpush2.bf16.msra.mxu0 0
    %280 = vmatprep.mubr.bf16.mxu0 0
    %281 = vmatmul.mubr.bf16.gmra.mxu0 %v246
    %v282 = vpop.f32.mrf.mxu0
    %v283 = vadd.f32 0.0, %v282
    %v284 = vpop.f32.mrf.mxu0
    %v285 = vpop.f32.mrf.mxu0
    %v286 = vpop.f32.mrf.mxu0
    %287 = vdwg.mxu0
    %289 = vrot.lane.b32.xlu0 %v221, 32
    %v290 = vpop.permute.xlu0 %289
    %v295 = vunpack.c.l.b16 %v223
    %v296 = vunpack.c.l.b16 %v224
    %v297 = vunpack.c.l.b16 %v225
    %v298 = vunpack.c.l.b16 %v226
    %v299 = vpack.c.b16 %v296, %v295
    %v300 = vpack.c.b16 %v298, %v297
    %v304 = vsel %vm62, %v290, 0
    %306 = vmatprep.subr.bf16.mxu0 0
    %307 = vmatpush1.bf16.msra.mxu0 0
    %308 = vmatprep.subr.bf16.mxu0 0
    %309 = vmatpush1.bf16.msra.mxu0 0
    %310 = vmatprep.subr.bf16.mxu0 0
    %311 = vmatpush1.bf16.msra.mxu0 0
    %312 = vmatprep.subr.bf16.mxu0 0
    %313 = vmatpush1.bf16.msra.mxu0 0
    %314 = vmatprep.subr.bf16.mxu0 0
    %315 = vmatpush1.bf16.msra.mxu0 0
    %316 = vmatprep.subr.bf16.mxu0 0
    %317 = vmatpush1.bf16.msra.mxu0 0
    %318 = vmatprep.subr.bf16.mxu0 0
    %319 = vmatpush1.bf16.msra.mxu0 %v300
    %320 = vmatprep.subr.bf16.mxu0 0
    %321 = vmatpush1.bf16.msra.mxu0 %v299
    %322 = vmatprep.subr.bf16.mxu0 0
    %323 = vmatpush2.bf16.msra.mxu0 0
    %324 = vmatprep.subr.bf16.mxu0 0
    %325 = vmatpush2.bf16.msra.mxu0 0
    %326 = vmatprep.subr.bf16.mxu0 0
    %327 = vmatpush2.bf16.msra.mxu0 0
    %328 = vmatprep.subr.bf16.mxu0 0
    %329 = vmatpush2.bf16.msra.mxu0 0
    %330 = vmatprep.subr.bf16.mxu0 0
    %331 = vmatpush2.bf16.msra.mxu0 0
    %332 = vmatprep.subr.bf16.mxu0 0
    %333 = vmatpush2.bf16.msra.mxu0 0
    %334 = vmatprep.subr.bf16.mxu0 0
    %335 = vmatpush2.bf16.msra.mxu0 0
    %336 = vmatprep.subr.bf16.mxu0 0
    %337 = vmatpush2.bf16.msra.mxu0 0
    %338 = vmatprep.mubr.bf16.mxu0 0
    %339 = vmatmul.mubr.bf16.gmra.mxu0 %v304
    %v340 = vpop.f32.mrf.mxu0
    %v341 = vadd.f32 %v283, %v340
    %v342 = vpop.f32.mrf.mxu0
    %v343 = vpop.f32.mrf.mxu0
    %v344 = vpop.f32.mrf.mxu0
    %345 = vdwg.mxu0
    %s346 = scalar_lea.vmem %s6, 1
    %v347 = vld [vmem:[%s346] sm:$0x1]
    %v349 = vlaneseq
    %v350 = vshrl.u32 %v349, 7
    %v351 = vsub.s32 0, %v350
    %v352 = vrot.slane %v347, %v351
    %v354 = vadd.f32 %v341, %v352
    %v355 = vmul.f32 %v354, 2.0
    %v356 = vsel %vm36, %v355, %v354
    %v357 = vxor.u32 %v356, 2147483648
    %v358 = vmul.f32 %v357, 1.442695
    %v359 = vpow.pop %v358
    %v360 = vadd.f32 %v359, 1.0
    %v361 = vrcp.pop %v360
    %v362 = vmul.f32 1.0, %v361
    %v363 = vmul.f32 %v362, 2.0
    %v364 = vsub.f32 %v363, 1.0
    %v365 = vsel %vm36, %v364, %v362
    %367 = vrot.lane.b32.xlu0 %v220, 32
    %v368 = vpop.permute.xlu0 %367
    %v370 = vmul.f32 %v365, %v368
    %372 = vrot.lane.b32.xlu0 %v365, 64
    %v373 = vpop.permute.xlu0 %372
    %v375 = vmul.f32 %v365, %v373
    %377 = vrot.lane.b32.xlu0 %v375, 32
    %v378 = vpop.permute.xlu0 %377
    %v380 = vadd.f32 %v370, %v378
    %v381 = vtanh.pop %v380
    %383 = vrot.lane.b32.xlu0 %v381, 64
    %v384 = vpop.permute.xlu0 %383
    %v386 = vmul.f32 %v365, %v384
    %388 = vrot.lane.b32.xlu0 %v386, 32
    %v389 = vpop.permute.xlu0 %388
    %s391 = scalar_lea.vmem [#allocation4], 2
    %392 = vst.msk [vmem:[%s391] sm:$0x3] %vm205, %v389
    %394 = vrot.lane.b32.xlu0 %v380, 96
    %v395 = vpop.permute.xlu0 %394
    %s397 = scalar_lea.vmem [#allocation6], 2
    %398 = vst.msk [vmem:[%s397] sm:$0x3] %vm205, %v395
    %v399 = vadd.f32 %v386, %v216
    %v400 = vld [vmem:[%s1] sm:$0xff]
    %v401 = vld [vmem:[%s1 + $0x8] sm:$0xff]
    %v402 = vpack.c.bf16 %v400, %v400
    %v403 = vpack.c.bf16 %v401, %v401
    %v404 = vpack.c.bf16 %v399, %v399
    %v407 = vunpack.c.l.s4 1966171168
    %v408 = vunpack.c.0.s8 %v407
    %v409 = vlaneseq
    %v410 = vshrl.u32 %v409, 7
    %v411 = vsub.s32 %v408, %v410
    %v412 = vrot.slane %v404, %v411
    %v414 = vunpack.c.l.s4 1966171168
    %v415 = vunpack.c.0.s8 %v414
    %v416 = vlaneseq
    %v417 = vshrl.u32 %v416, 7
    %v418 = vsub.s32 %v415, %v417
    %v419 = vrot.slane %v412, %v418
    %v420 = vunpack.i.l.s16 %v419
    %v421 = vunpack.i.h.s16 %v419
    %v422 = vpack.i.b16 %v420, %v420
    %v423 = vlaneseq
    %v424 = vshrl.u32 %v423, 7
    %v425 = vsub.s32 0, %v424
    %v426 = vrot.slane %v422, %v425
    %427 = vrot.lane.b32.xlu0 %v426, 32
    %v428 = vpop.permute.xlu0 %427
    %v430 = vsel %vm62, %v428, 0
    %v433 = vsel %vm62, %v402, 0
    %435 = vmatprep.subr.bf16.mxu0 0
    %436 = vmatpush1.bf16.xpose.msra.mxu0 0
    %437 = vmatprep.subr.bf16.mxu0 0
    %438 = vmatpush1.bf16.xpose.msra.mxu0 0
    %439 = vmatprep.subr.bf16.mxu0 0
    %440 = vmatpush1.bf16.xpose.msra.mxu0 0
    %441 = vmatprep.subr.bf16.mxu0 0
    %442 = vmatpush1.bf16.xpose.msra.mxu0 0
    %443 = vmatprep.subr.bf16.mxu0 0
    %444 = vmatpush1.bf16.xpose.msra.mxu0 0
    %445 = vmatprep.subr.bf16.mxu0 0
    %446 = vmatpush1.bf16.xpose.msra.mxu0 0
    %447 = vmatprep.subr.bf16.mxu0 0
    %448 = vmatpush1.bf16.xpose.msra.mxu0 0
    %449 = vmatprep.subr.bf16.mxu0 0
    %450 = vmatpush1.bf16.xpose.msra.mxu0 %v433
    %451 = vmatprep.subr.bf16.mxu0 0
    %452 = vmatpush2.bf16.xpose.msra.mxu0 0
    %453 = vmatprep.subr.bf16.mxu0 0
    %454 = vmatpush2.bf16.xpose.msra.mxu0 0
    %455 = vmatprep.subr.bf16.mxu0 0
    %456 = vmatpush2.bf16.xpose.msra.mxu0 0
    %457 = vmatprep.subr.bf16.mxu0 0
    %458 = vmatpush2.bf16.xpose.msra.mxu0 0
    %459 = vmatprep.subr.bf16.mxu0 0
    %460 = vmatpush2.bf16.xpose.msra.mxu0 0
    %461 = vmatprep.subr.bf16.mxu0 0
    %462 = vmatpush2.bf16.xpose.msra.mxu0 0
    %463 = vmatprep.subr.bf16.mxu0 0
    %464 = vmatpush2.bf16.xpose.msra.mxu0 0
    %465 = vmatprep.subr.bf16.mxu0 0
    %466 = vmatpush2.bf16.xpose.msra.mxu0 0
    %467 = vmatprep.mubr.bf16.mxu0 0
    %468 = vmatmul.mubr.bf16.gmra.mxu0 %v430
    %v469 = vpop.f32.mrf.mxu0
    %v470 = vadd.f32 0.0, %v469
    %v471 = vpop.f32.mrf.mxu0
    %v472 = vpop.f32.mrf.mxu0
    %v473 = vpop.f32.mrf.mxu0
    %474 = vdwg.mxu0
    %v475 = vpack.i.b16 %v421, %v421
    %v476 = vlaneseq
    %v477 = vshrl.u32 %v476, 7
    %v478 = vsub.s32 0, %v477
    %v479 = vrot.slane %v475, %v478
    %480 = vrot.lane.b32.xlu0 %v479, 32
    %v481 = vpop.permute.xlu0 %480
    %v483 = vsel %vm62, %v481, 0
    %v486 = vsel %vm62, %v403, 0
    %488 = vmatprep.subr.bf16.mxu0 0
    %489 = vmatpush1.bf16.xpose.msra.mxu0 0
    %490 = vmatprep.subr.bf16.mxu0 0
    %491 = vmatpush1.bf16.xpose.msra.mxu0 0
    %492 = vmatprep.subr.bf16.mxu0 0
    %493 = vmatpush1.bf16.xpose.msra.mxu0 0
    %494 = vmatprep.subr.bf16.mxu0 0
    %495 = vmatpush1.bf16.xpose.msra.mxu0 0
    %496 = vmatprep.subr.bf16.mxu0 0
    %497 = vmatpush1.bf16.xpose.msra.mxu0 0
    %498 = vmatprep.subr.bf16.mxu0 0
    %499 = vmatpush1.bf16.xpose.msra.mxu0 0
    %500 = vmatprep.subr.bf16.mxu0 0
    %501 = vmatpush1.bf16.xpose.msra.mxu0 0
    %502 = vmatprep.subr.bf16.mxu0 0
    %503 = vmatpush1.bf16.xpose.msra.mxu0 %v486
    %504 = vmatprep.subr.bf16.mxu0 0
    %505 = vmatpush2.bf16.xpose.msra.mxu0 0
    %506 = vmatprep.subr.bf16.mxu0 0
    %507 = vmatpush2.bf16.xpose.msra.mxu0 0
    %508 = vmatprep.subr.bf16.mxu0 0
    %509 = vmatpush2.bf16.xpose.msra.mxu0 0
    %510 = vmatprep.subr.bf16.mxu0 0
    %511 = vmatpush2.bf16.xpose.msra.mxu0 0
    %512 = vmatprep.subr.bf16.mxu0 0
    %513 = vmatpush2.bf16.xpose.msra.mxu0 0
    %514 = vmatprep.subr.bf16.mxu0 0
    %515 = vmatpush2.bf16.xpose.msra.mxu0 0
    %516 = vmatprep.subr.bf16.mxu0 0
    %517 = vmatpush2.bf16.xpose.msra.mxu0 0
    %518 = vmatprep.subr.bf16.mxu0 0
    %519 = vmatpush2.bf16.xpose.msra.mxu0 0
    %520 = vmatprep.mubr.bf16.mxu0 0
    %521 = vmatmul.mubr.bf16.gmra.mxu0 %v483
    %v522 = vpop.f32.mrf.mxu0
    %v523 = vadd.f32 0.0, %v522
    %v524 = vpop.f32.mrf.mxu0
    %v525 = vpop.f32.mrf.mxu0
    %v526 = vpop.f32.mrf.mxu0
    %527 = vdwg.mxu0
    %v530 = vrot.slane %v523, 7
    %vm531 = vcmask 1041409
    %v532 = vsel %vm531, %v530, %v470
    %vm534 = vcmask 58368
    %v535 = vsel %vm534, %v532, -inf
    %536 = vmax.xlane.f32.xlu0 %v535
    %v537 = vpop.xlane.xlu0 %536
    %v539 = vrot.slane %v537, 1
    %v542 = vsub.f32 %v470, %v537
    %v543 = vsub.f32 %v523, %v539
    %v544 = vmul.f32 %v542, 1.442695
    %v545 = vpow.pop %v544
    %v546 = vmul.f32 %v543, 1.442695
    %v547 = vpow.pop %v546
    %v550 = vrot.slane %v547, 7
    %v551 = vsel %vm531, %v550, %v545
    %v553 = vsel %vm534, %v551, 0.0
    %554 = vadd.xlane.f32.xlu0 %v553
    %v555 = vpop.xlane.xlu0 %554
    %v556 = vrcp.pop %v555
    %v558 = vrot.slane %v556, 1
    %v561 = vmul.f32 %v545, %v556
    %v562 = vmul.f32 %v547, %v558
    %v563 = vpack.c.bf16 %v561, %v561
    %v564 = vpack.c.bf16 %v562, %v562
    %vm565 = vcmask 64512
    %v567 = vsel %vm565, %v563, 0
    %vm569 = vcmask 1043456
    %v570 = vsel %vm569, %v402, 0
    %572 = vmatprep.subr.bf16.mxu0 0
    %573 = vmatpush1.bf16.msra.mxu0 0
    %574 = vmatprep.subr.bf16.mxu0 0
    %575 = vmatpush1.bf16.msra.mxu0 0
    %576 = vmatprep.subr.bf16.mxu0 0
    %577 = vmatpush1.bf16.msra.mxu0 0
    %578 = vmatprep.subr.bf16.mxu0 0
    %579 = vmatpush1.bf16.msra.mxu0 0
    %580 = vmatprep.subr.bf16.mxu0 0
    %581 = vmatpush1.bf16.msra.mxu0 0
    %582 = vmatprep.subr.bf16.mxu0 0
    %583 = vmatpush1.bf16.msra.mxu0 0
    %584 = vmatprep.subr.bf16.mxu0 0
    %585 = vmatpush1.bf16.msra.mxu0 0
    %586 = vmatprep.subr.bf16.mxu0 0
    %587 = vmatpush1.bf16.msra.mxu0 %v570
    %588 = vmatprep.subr.bf16.mxu0 0
    %589 = vmatpush2.bf16.msra.mxu0 0
    %590 = vmatprep.subr.bf16.mxu0 0
    %591 = vmatpush2.bf16.msra.mxu0 0
    %592 = vmatprep.subr.bf16.mxu0 0
    %593 = vmatpush2.bf16.msra.mxu0 0
    %594 = vmatprep.subr.bf16.mxu0 0
    %595 = vmatpush2.bf16.msra.mxu0 0
    %596 = vmatprep.subr.bf16.mxu0 0
    %597 = vmatpush2.bf16.msra.mxu0 0
    %598 = vmatprep.subr.bf16.mxu0 0
    %599 = vmatpush2.bf16.msra.mxu0 0
    %600 = vmatprep.subr.bf16.mxu0 0
    %601 = vmatpush2.bf16.msra.mxu0 0
    %602 = vmatprep.subr.bf16.mxu0 0
    %603 = vmatpush2.bf16.msra.mxu0 0
    %604 = vmatprep.mubr.bf16.mxu0 0
    %605 = vmatmul.mubr.bf16.gmra.mxu0 %v567
    %v606 = vpop.f32.mrf.mxu0
    %v607 = vadd.f32 0.0, %v606
    %v608 = vpop.f32.mrf.mxu0
    %v609 = vpop.f32.mrf.mxu0
    %v610 = vpop.f32.mrf.mxu0
    %611 = vdwg.mxu0
    %v613 = vsel %vm565, %v564, 0
    %v615 = vsel %vm569, %v403, 0
    %617 = vmatprep.subr.bf16.mxu0 0
    %618 = vmatpush1.bf16.msra.mxu0 0
    %619 = vmatprep.subr.bf16.mxu0 0
    %620 = vmatpush1.bf16.msra.mxu0 0
    %621 = vmatprep.subr.bf16.mxu0 0
    %622 = vmatpush1.bf16.msra.mxu0 0
    %623 = vmatprep.subr.bf16.mxu0 0
    %624 = vmatpush1.bf16.msra.mxu0 0
    %625 = vmatprep.subr.bf16.mxu0 0
    %626 = vmatpush1.bf16.msra.mxu0 0
    %627 = vmatprep.subr.bf16.mxu0 0
    %628 = vmatpush1.bf16.msra.mxu0 0
    %629 = vmatprep.subr.bf16.mxu0 0
    %630 = vmatpush1.bf16.msra.mxu0 0
    %631 = vmatprep.subr.bf16.mxu0 0
    %632 = vmatpush1.bf16.msra.mxu0 %v615
    %633 = vmatprep.subr.bf16.mxu0 0
    %634 = vmatpush2.bf16.msra.mxu0 0
    %635 = vmatprep.subr.bf16.mxu0 0
    %636 = vmatpush2.bf16.msra.mxu0 0
    %637 = vmatprep.subr.bf16.mxu0 0
    %638 = vmatpush2.bf16.msra.mxu0 0
    %639 = vmatprep.subr.bf16.mxu0 0
    %640 = vmatpush2.bf16.msra.mxu0 0
    %641 = vmatprep.subr.bf16.mxu0 0
    %642 = vmatpush2.bf16.msra.mxu0 0
    %643 = vmatprep.subr.bf16.mxu0 0
    %644 = vmatpush2.bf16.msra.mxu0 0
    %645 = vmatprep.subr.bf16.mxu0 0
    %646 = vmatpush2.bf16.msra.mxu0 0
    %647 = vmatprep.subr.bf16.mxu0 0
    %648 = vmatpush2.bf16.msra.mxu0 0
    %649 = vmatprep.mubr.bf16.mxu0 0
    %650 = vmatmul.mubr.bf16.gmra.mxu0 %v613
    %v651 = vpop.f32.mrf.mxu0
    %v652 = vadd.f32 0.0, %v651
    %v653 = vpop.f32.mrf.mxu0
    %v654 = vpop.f32.mrf.mxu0
    %v655 = vpop.f32.mrf.mxu0
    %656 = vdwg.mxu0
    %v659 = vrot.slane %v652, 7
    %v660 = vsel %vm531, %v659, %v607
    %662 = vst.msk [vmem:[#allocation2] sm:$0x3] %vm205, %v660
    // Predicated region
    $region30: #{_lambda_.1} parent=1 // pred_check
      _
    $region31: #{_lambda_.1} parent=1 // pred_check_branch
      %664 = sbr.rel (0) target = $region33
    $region32: #{_lambda_.1} parent=1 // pred_region
      %s666 = ssub.s32 32, 32
      %667 = vsyncadd [#allocation3], %s666
      %s669 = sshll.u32 [#allocation2], 4
      %s670 = int_to_ptr.vmem [resolvable:$true] %s669
      %672 = dma.vmem_to_hbm [thread:$0]  %s670, 32, %s7, [#allocation3]
    $region33: #{_lambda_.1} parent=1 // pred_fallthru
      _
    // Predicated region
    $region34: #{_lambda_.1} parent=1 // pred_check
      _
    $region35: #{_lambda_.1} parent=1 // pred_check_branch
      %674 = sbr.rel (0) target = $region37
    $region36: #{_lambda_.1} parent=1 // pred_region
      %s676 = ssub.s32 64, 64
      %677 = vsyncadd [#allocation5], %s676
      %s678 = sshll.u32 [#allocation4], 4
      %s679 = int_to_ptr.vmem [resolvable:$true] %s678
      %684 = dma.vmem_to_hbm [thread:$0]  %s679, 64, %s8, [#allocation5], 32, 32, 2
    $region37: #{_lambda_.1} parent=1 // pred_fallthru
      _
    // Predicated region
    $region38: #{_lambda_.1} parent=1 // pred_check
      _
    $region39: #{_lambda_.1} parent=1 // pred_check_branch
      %686 = sbr.rel (0) target = $region41
    $region40: #{_lambda_.1} parent=1 // pred_region
      %s688 = ssub.s32 64, 64
      %689 = vsyncadd [#allocation5], %s688
      %s690 = sshll.u32 [#allocation6], 4
      %s691 = int_to_ptr.vmem [resolvable:$true] %s690
      %696 = dma.vmem_to_hbm [thread:$0]  %s691, 64, %s9, [#allocation5], 32, 32, 2
    $region41: #{_lambda_.1} parent=1 // pred_fallthru
      _
    // Predicated region
    $region42: #{_lambda_.1} parent=1 // pred_check
      _
    $region43: #{_lambda_.1} parent=1 // pred_check_branch
      %698 = sbr.rel (0) target = $region45
    $region44: #{_lambda_.1} parent=1 // pred_region
      %699 = dma.done [#allocation3], 32
    $region45: #{_lambda_.1} parent=1 // pred_fallthru
      _
    // Predicated region
    $region46: #{_lambda_.1} parent=1 // pred_check
      _
    $region47: #{_lambda_.1} parent=1 // pred_check_branch
      %701 = sbr.rel (0) target = $region49
    $region48: #{_lambda_.1} parent=1 // pred_region
      %702 = dma.done [#allocation5], 64
    $region49: #{_lambda_.1} parent=1 // pred_fallthru
      _
    // Predicated region
    $region50: #{_lambda_.1} parent=1 // pred_check
      _
    $region51: #{_lambda_.1} parent=1 // pred_check_branch
      %704 = sbr.rel (0) target = $region53
    $region52: #{_lambda_.1} parent=1 // pred_region
      %705 = dma.done [#allocation5], 64
    $region53: #{_lambda_.1} parent=1 // pred_fallthru
      _
    %706 = vsyncpa [#allocation3], 1
    %707 = vsyncpa [#allocation5], 1

</llo_original>
